<compile_context>
chip_gen: v6e
topology: v6e:2x2x1
jax: 0.10.0
libtpu: 0.0.40
codegen_flags: <defaults>
</compile_context>

<pallas_src>
import functools

import jax
import jax.numpy as jnp
from jax.experimental import pallas as pl
from jax.experimental.pallas import tpu as pltpu


_LANE = 128                                 # minor-dim granule
_TM_MAX = 512                               # M-tile cap (arithmetic intensity)
_TN_MAX = 512                               # N-tile cap (streamed-weight path)
_TK_MAX = 2048                              # K-tile cap (streamed-weight path)
_WEIGHT_RESIDENT_BYTES = 6 * 1024 * 1024    # keep whole bf16 W in VMEM if <=
_WEIGHT_RESIDENT_MAX_DIM = 4096             # ... and both padded dims <= this


def _round_up(x: int, m: int) -> int:
    return ((x + m - 1) // m) * m


def _cdiv(a: int, b: int) -> int:
    return -(-a // b)


def _choose_tile(padded_dim: int, granule: int, cap: int):
    """Return (tile, final_dim): tile is a multiple of `granule`, <= cap when
    possible, divides final_dim exactly, and final_dim >= padded_dim with
    minimal extra padding."""
    cap = max(granule, (cap // granule) * granule)
    if padded_dim <= cap:
        return padded_dim, padded_dim
    steps = _cdiv(padded_dim, cap)
    tile = _round_up(_cdiv(padded_dim, steps), granule)
    return tile, _round_up(padded_dim, tile)


# --------------------------------------------------------------------------
# Kernels
# --------------------------------------------------------------------------
def _linear_kernel(x_ref, w_ref, b_ref, o_ref):
    """Single-K-step tile: out = x @ W + b (bf16 MXU inputs, f32 accumulate)."""
    acc = jnp.dot(x_ref[...].astype(jnp.bfloat16), w_ref[...],
                  preferred_element_type=jnp.float32)
    o_ref[...] = (acc + b_ref[...]).astype(o_ref.dtype)


def _linear_kernel_kacc(x_ref, w_ref, b_ref, o_ref, acc_ref):
    """Multi-K-step tile with f32 VMEM accumulator; K is the innermost axis."""
    k = pl.program_id(2)

    @pl.when(k == 0)
    def _():
        # Fold the bias into the accumulator init (added exactly once/tile).
        acc_ref[...] = jnp.broadcast_to(b_ref[...], acc_ref.shape)

    acc_ref[...] += jnp.dot(x_ref[...].astype(jnp.bfloat16), w_ref[...],
                            preferred_element_type=jnp.float32)

    @pl.when(k == pl.num_programs(2) - 1)
    def _():
        o_ref[...] = acc_ref[...].astype(o_ref.dtype)


# --------------------------------------------------------------------------
# Wrapper
# --------------------------------------------------------------------------
@functools.partial(jax.jit, static_argnames=("horizon", "tn", "tk"))
def _linear_forecast(x, w_padded, b_padded, *, horizon, tn, tk):
    """y = x @ W + b with a pre-padded bf16 weight [k_p, n_p], f32 bias [1, n_p].

    x: [batch, input_len] (any float dtype; cast to bf16 inside the kernel).
    Returns [batch, horizon] in x.dtype.
    """
    batch, in_len = x.shape
    k_p, n_p = w_padded.shape
    out_dtype = x.dtype

    # ---- M tiling (sublane granule: 8 for 4-byte, 16 for 2-byte dtypes) ----
    m_granule = 8 if jnp.dtype(out_dtype).itemsize >= 4 else 16
    m_p0 = _round_up(batch, m_granule)
    tm, m_p = _choose_tile(m_p0, m_granule, _TM_MAX)
    m_steps = m_p // tm
    local_tn = tn

    # ---- guarantee >= 2 "parallel" tiles so a 2-TC chip (v7x) isn't half idle
    if m_steps == 1:
        if m_p >= 2 * m_granule:
            tm = _round_up(_cdiv(m_p, 2), m_granule)
            m_p = _round_up(m_p, tm)
            m_steps = m_p // tm
        elif local_tn % (2 * _LANE) == 0:
            local_tn //= 2

    n_steps = n_p // local_tn
    k_steps = k_p // tk

    # ---- pad x in its own dtype only if needed (zero K-padding is exact) ----
    if (m_p, k_p) != (batch, in_len):
        x = jnp.pad(x, ((0, m_p - batch), (0, k_p - in_len)))

    # ---- VMEM budget from the actual double-buffered tile footprint ----
    x_item = jnp.dtype(x.dtype).itemsize
    out_item = jnp.dtype(out_dtype).itemsize
    needed = 2 * (tm * tk * x_item + tk * local_tn * 2
                  + 8 * local_tn * 4 + tm * local_tn * out_item)
    if k_steps > 1:
        needed += tm * local_tn * 4
    vmem_limit = int(min(max(2 * needed, 16 * 1024 * 1024), 56 * 1024 * 1024))

    if k_steps == 1:
        # Resident-weight / single-K-step path: no scratch, no K grid axis.
        # Weight index_map is constant along M, so it is DMA'd from HBM once.
        out_padded = pl.pallas_call(
            _linear_kernel,
            out_shape=jax.ShapeDtypeStruct((m_p, n_p), out_dtype),
            grid_spec=pltpu.PrefetchScalarGridSpec(
                num_scalar_prefetch=0,
                grid=(m_steps, n_steps),
                in_specs=[
                    pl.BlockSpec((tm, tk), lambda i, j: (i, 0)),
                    pl.BlockSpec((tk, local_tn), lambda i, j: (0, j)),
                    pl.BlockSpec((1, local_tn), lambda i, j: (0, j)),
                ],
                out_specs=pl.BlockSpec((tm, local_tn), lambda i, j: (i, j)),
            ),
            compiler_params=pltpu.CompilerParams(
                dimension_semantics=("parallel", "parallel"),
                vmem_limit_bytes=vmem_limit,
            ),
        )(x, w_padded, b_padded)
    else:
        # Streamed-weight path: 3-D grid with f32 accumulator, K innermost.
        out_padded = pl.pallas_call(
            _linear_kernel_kacc,
            out_shape=jax.ShapeDtypeStruct((m_p, n_p), out_dtype),
            grid_spec=pltpu.PrefetchScalarGridSpec(
                num_scalar_prefetch=0,
                grid=(m_steps, n_steps, k_steps),
                in_specs=[
                    pl.BlockSpec((tm, tk), lambda i, j, k: (i, k)),
                    pl.BlockSpec((tk, local_tn), lambda i, j, k: (k, j)),
                    pl.BlockSpec((1, local_tn), lambda i, j, k: (0, j)),
                ],
                out_specs=pl.BlockSpec((tm, local_tn), lambda i, j, k: (i, j)),
                scratch_shapes=[pltpu.VMEM((tm, local_tn), jnp.float32)],
            ),
            compiler_params=pltpu.CompilerParams(
                dimension_semantics=("parallel", "parallel", "arbitrary"),
                vmem_limit_bytes=vmem_limit,
            ),
        )(x, w_padded, b_padded)

    # ---- slice only dims that were actually padded ----
    out = out_padded
    if m_p != batch:
        out = out[:batch]
    if n_p != horizon:
        out = out[:, :horizon]
    return out


# --------------------------------------------------------------------------
# Module
# --------------------------------------------------------------------------
class PallasModel:
    """JAX/Pallas analogue of the PyTorch forecasting `Model` base class."""

    def __init__(self, input_len: int, horizon_len: int, dropout: float):
        self.input_len = input_len
        self.output_size = horizon_len
        self.dropout = dropout  # stored only; identity at inference (eval mode)
        # TODO(synk): `forward` is abstract in the reference module; a linear
        #             input_len -> horizon_len head is the concrete forward.

        # ---- deterministic f32 master parameters ----
        kw, kb = jax.random.split(jax.random.PRNGKey(42))
        scale = 1.0 / jnp.sqrt(jnp.float32(input_len))
        self.weight = (jax.random.normal(kw, (input_len, horizon_len),
                                         dtype=jnp.float32) * scale)
        self.bias = (jax.random.normal(kb, (1, horizon_len),
                                       dtype=jnp.float32) * 0.01)

        # ---- one-time kernel-side layout: bf16 cast + pad to the tile grid ----
        k_p = _round_up(input_len, _LANE)
        n_p = _round_up(horizon_len, _LANE)
        resident = (k_p * n_p * 2 <= _WEIGHT_RESIDENT_BYTES
                    and k_p <= _WEIGHT_RESIDENT_MAX_DIM
                    and n_p <= _WEIGHT_RESIDENT_MAX_DIM)
        if resident:
            self._tk, self._tn = k_p, n_p
        else:
            self._tk, k_p = _choose_tile(k_p, _LANE, _TK_MAX)
            self._tn, n_p = _choose_tile(n_p, _LANE, _TN_MAX)

        self._w_padded = jnp.pad(self.weight.astype(jnp.bfloat16),
                                 ((0, k_p - input_len), (0, n_p - horizon_len)))
        self._b_padded = jnp.pad(self.bias, ((0, 0), (0, n_p - horizon_len)))

    def get_horizon_len(self):
        return self.output_size

    def __call__(self, x):
        assert x.ndim == 2 and x.shape[1] == self.input_len
        return _linear_forecast(x, self._w_padded, self._b_padded,
                                horizon=self.output_size,
                                tn=self._tn, tk=self._tk)


def _bf16_reference(x, w, b):
    # Matches the kernel's bf16-input / f32-accumulate numerics.
    xr = x.astype(jnp.bfloat16).astype(jnp.float32)
    wr = w.astype(jnp.bfloat16).astype(jnp.float32)
    return xr @ wr + b


if __name__ == "__main__":
    # ---- small shapes consistent with the module's constructor arguments ----
    batch, input_len, horizon_len, dropout = 8, 32, 16, 0.1
    model = PallasModel(input_len=input_len, horizon_len=horizon_len,
                        dropout=dropout)
    x = jax.random.normal(jax.random.PRNGKey(0), (batch, input_len),
                          dtype=jnp.float32)
    y = jax.block_until_ready(model(x))
    assert y.shape == (batch, model.get_horizon_len())
    assert jnp.allclose(y, _bf16_reference(x, model.weight, model.bias),
                        atol=2e-3, rtol=2e-3)
    assert jnp.allclose(y, x @ model.weight + model.bias, atol=5e-2, rtol=5e-2)

    # ---- medium shape: padding, megacore M split, resident-weight path ----
    model2 = PallasModel(input_len=600, horizon_len=200, dropout=dropout)
    x2 = jax.random.normal(jax.random.PRNGKey(1), (300, 600), dtype=jnp.float32)
    y2 = jax.block_until_ready(model2(x2))
    assert y2.shape == (300, 200)
    assert jnp.allclose(y2, _bf16_reference(x2, model2.weight, model2.bias),
                        atol=5e-3, rtol=5e-3)

    # ---- force the multi-K-step accumulator path at small shapes ----
    in3, hor3, b3 = 200, 130, 20
    k_p3, n_p3 = _round_up(in3, _LANE), _round_up(hor3, _LANE)
    kw3, kb3 = jax.random.split(jax.random.PRNGKey(7))
    w3 = jax.random.normal(kw3, (in3, hor3), jnp.float32) / jnp.sqrt(float(in3))
    bias3 = jax.random.normal(kb3, (1, hor3), jnp.float32) * 0.01
    w3_p = jnp.pad(w3.astype(jnp.bfloat16), ((0, k_p3 - in3), (0, n_p3 - hor3)))
    b3_p = jnp.pad(bias3, ((0, 0), (0, n_p3 - hor3)))
    x3 = jax.random.normal(jax.random.PRNGKey(2), (b3, in3), dtype=jnp.float32)
    y3 = jax.block_until_ready(
        _linear_forecast(x3, w3_p, b3_p, horizon=hor3, tn=128, tk=128))
    assert y3.shape == (b3, hor3)
    assert jnp.allclose(y3, _bf16_reference(x3, w3, bias3), atol=5e-3, rtol=5e-3)

    print("KERNEL_OK")
</pallas_src>

<mosaic_0001>
module attributes {stable_mosaic.version = 11 : i64} {
  func.func @_linear_kernel(%arg0: i32, %arg1: i32, %arg2: memref<8x128xf32, #tpu.memory_space<vmem>>, %arg3: memref<128x128xbf16, #tpu.memory_space<vmem>>, %arg4: memref<1x128xf32, #tpu.memory_space<vmem>>, %arg5: memref<8x128xf32, #tpu.memory_space<vmem>>) attributes {dimension_semantics = [#tpu.dimension_semantics<parallel>, #tpu.dimension_semantics<parallel>], iteration_bounds = array<i64: 1, 1>, scalar_prefetch = 0 : i64, scratch_operands = 0 : i64, tpu.core_type = #tpu.core_type<tc>, window_params = [{transform_indices = @transform_0, window_bounds = array<i64: 8, 128>}, {transform_indices = @transform_1, window_bounds = array<i64: 128, 128>}, {transform_indices = @transform_2, window_bounds = array<i64: 1, 128>}, {transform_indices = @transform_3, window_bounds = array<i64: 8, 128>}]} {
    %c0 = arith.constant 0 : index
    %c0_0 = arith.constant 0 : index
    %0 = vector.load %arg2[%c0, %c0_0] : memref<8x128xf32, #tpu.memory_space<vmem>>, vector<8x128xf32>
    %1 = arith.truncf %0 : vector<8x128xf32> to vector<8x128xbf16>
    %c0_1 = arith.constant 0 : index
    %c0_2 = arith.constant 0 : index
    %2 = vector.load %arg3[%c0_1, %c0_2] : memref<128x128xbf16, #tpu.memory_space<vmem>>, vector<128x128xbf16>
    %cst = arith.constant dense<0.000000e+00> : vector<8x128xf32>
    %3 = tpu.matmul %1, %2, %cst {dimension_numbers = #tpu.dot_dimension_numbers<[1], [0], [0], [1], [0, 0, 1, 1], [], []>} : vector<8x128xbf16>, vector<128x128xbf16>, vector<8x128xf32> -> vector<8x128xf32>
    %c0_3 = arith.constant 0 : index
    %c0_4 = arith.constant 0 : index
    %4 = vector.load %arg4[%c0_3, %c0_4] : memref<1x128xf32, #tpu.memory_space<vmem>>, vector<1x128xf32>
    %5 = vector.broadcast %4 : vector<1x128xf32> to vector<8x128xf32>
    %6 = arith.addf %3, %5 : vector<8x128xf32>
    %c0_5 = arith.constant 0 : index
    %c0_6 = arith.constant 0 : index
    %7 = vector.load %arg5[%c0_5, %c0_6] : memref<8x128xf32, #tpu.memory_space<vmem>>, vector<8x128xf32>
    tpu.vector_store %arg5[%c0_5, %c0_6], %6 {strides = array<i32>} : memref<8x128xf32, #tpu.memory_space<vmem>>, vector<8x128xf32>,
    return
  }
  func.func @transform_0(%arg0: i32, %arg1: i32) -> (i32, i32) {
    %c0_i32 = arith.constant 0 : i32
    %c0_i32_0 = arith.constant 0 : i32
    return %arg0, %c0_i32 : i32, i32
  }
  func.func @transform_1(%arg0: i32, %arg1: i32) -> (i32, i32) {
    %c0_i32 = arith.constant 0 : i32
    %c0_i32_0 = arith.constant 0 : i32
    return %c0_i32, %arg1 : i32, i32
  }
  func.func @transform_2(%arg0: i32, %arg1: i32) -> (i32, i32) {
    %c0_i32 = arith.constant 0 : i32
    %c0_i32_0 = arith.constant 0 : i32
    return %c0_i32, %arg1 : i32, i32
  }
  func.func @transform_3(%arg0: i32, %arg1: i32) -> (i32, i32) {
    %c0_i32 = arith.constant 0 : i32
    return %arg0, %arg1 : i32, i32
  }
}

</mosaic_0001>

<llo_original>
// kernel: _linear_forecast.1
$region0: #{_linear_forecast.1}
  #allocation0 [shape = 'u32[]', space=smem, size = 0x4, offset = 0x4, fixed_abs, tag = 'smem constant byte address 0x4 - core index']
  #allocation1 [shape = 'u32[144,128]{1,0:T(1,128)}', space=vmem, size = 0x12000, scoped, tag = 'internal scratch']
  %s0 = inlined_call_operand.vmem [shape: f32[8,128], index: 0, kind: input, shape index: {}]
  %s1 = inlined_call_operand.hbm [shape: bf16[128,128], index: 1, kind: input, shape index: {}]
  %s2 = inlined_call_operand.vmem [shape: f32[1,128], index: 2, kind: input, shape index: {}]
  %s3 = inlined_call_operand.hbm [shape: f32[8,128], index: 3, kind: output, shape index: {}]
  %s4 = sld [smem:[#allocation0]]
  $region26: #{_linear_forecast.1} parent=0
    _
  %s6 = ssub.s32 1, %s4
  %s7 = scalar_select 0, %s6, %s4
  $region1: #{_linear_forecast.1} parent=0
    #allocation2 [shape = 'u8[32768]{0}', space=vmem, size = 0x8000, scoped, tag = 'input window, operand 1, single buffered']
    #allocation3 [shape = 's32[1]{0}', space=sflag, size = 0x4, scoped, tag = 'scoped memory for _linear_forecast.1']
    #allocation4 [shape = 's32[1]{0}', space=sflag, size = 0x4, scoped, tag = 'scoped memory for _linear_forecast.1']
    #allocation5 [shape = 'u8[4096]{0}', space=vmem, size = 0x1000, scoped, tag = 'output window, operand 0, single buffered']
    %8 = vsyncpa [#allocation3], 0
    %9 = vsyncpa [#allocation4], 0
    // Predicated region
    $region2: #{_linear_forecast.1} parent=1 // pred_check
      _
    $region3: #{_linear_forecast.1} parent=1 // pred_check_branch
      %11 = sbr.rel (0) target = $region5
    $region4: #{_linear_forecast.1} parent=1 // pred_region
      _
    $region5: #{_linear_forecast.1} parent=1 // pred_fallthru
      _
    // Predicated region
    $region6: #{_linear_forecast.1} parent=1 // pred_check
      _
    $region7: #{_linear_forecast.1} parent=1 // pred_check_branch
      %13 = sbr.rel (0) target = $region9
    $region8: #{_linear_forecast.1} parent=1 // pred_region
      %s15 = ssub.s32 1024, 1024
      %16 = vsyncadd [#allocation3], %s15
      %s17 = sshll.u32 [#allocation2], 4
      %s18 = int_to_ptr.vmem [resolvable:$true] %s17
      %23 = dma.hbm_to_vmem [thread:$0]  %s1, 1024, %s18, [#allocation3], 64, 64, 4
    $region9: #{_linear_forecast.1} parent=1 // pred_fallthru
      _
    // Predicated region
    $region10: #{_linear_forecast.1} parent=1 // pred_check
      _
    $region11: #{_linear_forecast.1} parent=1 // pred_check_branch
      %25 = sbr.rel (0) target = $region13
    $region12: #{_linear_forecast.1} parent=1 // pred_region
      _
    $region13: #{_linear_forecast.1} parent=1 // pred_fallthru
      _
    // Predicated region
    $region14: #{_linear_forecast.1} parent=1 // pred_check
      _
    $region15: #{_linear_forecast.1} parent=1 // pred_check_branch
      %27 = sbr.rel (0) target = $region17
    $region16: #{_linear_forecast.1} parent=1 // pred_region
      %28 = dma.done [#allocation3], 1024
    $region17: #{_linear_forecast.1} parent=1 // pred_fallthru
      _
    %v30 = vld [vmem:[%s0] sm:$0xff]
    %v31 = vpack.c.bf16 %v30, %v30
    %v32 = vld [vmem:[#allocation2] sm:$0xf]
    %v33 = vld [vmem:[#allocation2 + $0x4] sm:$0xf]
    %v34 = vld [vmem:[#allocation2 + $0x8] sm:$0xf]
    %v35 = vld [vmem:[#allocation2 + $0xc] sm:$0xf]
    %v36 = vld [vmem:[#allocation2 + $0x10] sm:$0xf]
    %v37 = vld [vmem:[#allocation2 + $0x14] sm:$0xf]
    %v38 = vld [vmem:[#allocation2 + $0x18] sm:$0xf]
    %v39 = vld [vmem:[#allocation2 + $0x1c] sm:$0xf]
    %v40 = vld [vmem:[#allocation2 + $0x20] sm:$0xf]
    %v41 = vld [vmem:[#allocation2 + $0x24] sm:$0xf]
    %v42 = vld [vmem:[#allocation2 + $0x28] sm:$0xf]
    %v43 = vld [vmem:[#allocation2 + $0x2c] sm:$0xf]
    %v44 = vld [vmem:[#allocation2 + $0x30] sm:$0xf]
    %v45 = vld [vmem:[#allocation2 + $0x34] sm:$0xf]
    %v46 = vld [vmem:[#allocation2 + $0x38] sm:$0xf]
    %v47 = vld [vmem:[#allocation2 + $0x3c] sm:$0xf]
    %v48 = vld [vmem:[%s2] sm:$0x1]
    %v50 = vlaneseq
    %v51 = vshrl.u32 %v50, 7
    %v52 = vsub.s32 0, %v51
    %v53 = vrot.slane %v48, %v52
    %v71 = vunpack.c.l.b16 %v32
    %v72 = vunpack.c.l.b16 %v33
    %v73 = vunpack.c.l.b16 %v34
    %v74 = vunpack.c.l.b16 %v35
    %v75 = vunpack.c.l.b16 %v36
    %v76 = vunpack.c.l.b16 %v37
    %v77 = vunpack.c.l.b16 %v38
    %v78 = vunpack.c.l.b16 %v39
    %v79 = vunpack.c.l.b16 %v40
    %v80 = vunpack.c.l.b16 %v41
    %v81 = vunpack.c.l.b16 %v42
    %v82 = vunpack.c.l.b16 %v43
    %v83 = vunpack.c.l.b16 %v44
    %v84 = vunpack.c.l.b16 %v45
    %v85 = vunpack.c.l.b16 %v46
    %v86 = vunpack.c.l.b16 %v47
    %v87 = vpack.c.b16 %v72, %v71
    %v88 = vpack.c.b16 %v74, %v73
    %v89 = vpack.c.b16 %v76, %v75
    %v90 = vpack.c.b16 %v78, %v77
    %v91 = vpack.c.b16 %v80, %v79
    %v92 = vpack.c.b16 %v82, %v81
    %v93 = vpack.c.b16 %v84, %v83
    %v94 = vpack.c.b16 %v86, %v85
    %103 = vmatprep.subr.bf16.mxu0 0
    %104 = vmatpush1.bf16.msra.mxu0 %v94
    %105 = vmatprep.subr.bf16.mxu0 0
    %106 = vmatpush1.bf16.msra.mxu0 %v93
    %107 = vmatprep.subr.bf16.mxu0 0
    %108 = vmatpush1.bf16.msra.mxu0 %v92
    %109 = vmatprep.subr.bf16.mxu0 0
    %110 = vmatpush1.bf16.msra.mxu0 %v91
    %111 = vmatprep.subr.bf16.mxu0 0
    %112 = vmatpush1.bf16.msra.mxu0 %v90
    %113 = vmatprep.subr.bf16.mxu0 0
    %114 = vmatpush1.bf16.msra.mxu0 %v89
    %115 = vmatprep.subr.bf16.mxu0 0
    %116 = vmatpush1.bf16.msra.mxu0 %v88
    %117 = vmatprep.subr.bf16.mxu0 0
    %118 = vmatpush1.bf16.msra.mxu0 %v87
    %119 = vmatprep.subr.bf16.mxu0 0
    %120 = vmatpush2.bf16.msra.mxu0 0
    %121 = vmatprep.subr.bf16.mxu0 0
    %122 = vmatpush2.bf16.msra.mxu0 0
    %123 = vmatprep.subr.bf16.mxu0 0
    %124 = vmatpush2.bf16.msra.mxu0 0
    %125 = vmatprep.subr.bf16.mxu0 0
    %126 = vmatpush2.bf16.msra.mxu0 0
    %127 = vmatprep.subr.bf16.mxu0 0
    %128 = vmatpush2.bf16.msra.mxu0 0
    %129 = vmatprep.subr.bf16.mxu0 0
    %130 = vmatpush2.bf16.msra.mxu0 0
    %131 = vmatprep.subr.bf16.mxu0 0
    %132 = vmatpush2.bf16.msra.mxu0 0
    %133 = vmatprep.subr.bf16.mxu0 0
    %134 = vmatpush2.bf16.msra.mxu0 0
    %135 = vmatprep.mubr.bf16.mxu0 0
    %136 = vmatmul.mubr.bf16.gmra.mxu0 %v31
    %v137 = vpop.f32.mrf.mxu0
    %v138 = vadd.f32 %v53, %v137
    %v139 = vpop.f32.mrf.mxu0
    %v140 = vpop.f32.mrf.mxu0
    %v141 = vpop.f32.mrf.mxu0
    %142 = vdwg.mxu0
    %143 = vst [vmem:[#allocation5] sm:$0xff] %v138
    // Predicated region
    $region18: #{_linear_forecast.1} parent=1 // pred_check
      _
    $region19: #{_linear_forecast.1} parent=1 // pred_check_branch
      %145 = sbr.rel (0) target = $region21
    $region20: #{_linear_forecast.1} parent=1 // pred_region
      %s147 = ssub.s32 128, 128
      %148 = vsyncadd [#allocation4], %s147
      %s150 = sshll.u32 [#allocation5], 4
      %s151 = int_to_ptr.vmem [resolvable:$true] %s150
      %153 = dma.vmem_to_hbm [thread:$0]  %s151, 128, %s3, [#allocation4]
    $region21: #{_linear_forecast.1} parent=1 // pred_fallthru
      _
    // Predicated region
    $region22: #{_linear_forecast.1} parent=1 // pred_check
      _
    $region23: #{_linear_forecast.1} parent=1 // pred_check_branch
      %155 = sbr.rel (0) target = $region25
    $region24: #{_linear_forecast.1} parent=1 // pred_region
      %156 = dma.done [#allocation4], 128
    $region25: #{_linear_forecast.1} parent=1 // pred_fallthru
      _
    %157 = vsyncpa [#allocation3], 1
    %158 = vsyncpa [#allocation4], 1

</llo_original>
